<compile_context>
chip_gen: v6e
topology: v6e:2x2x1
jax: 0.10.0
libtpu: 0.0.40
codegen_flags: <defaults>
</compile_context>

<pallas_src>
import jax
import jax.numpy as jnp
from jax import lax
from jax.experimental import pallas as pl
from jax.experimental.pallas import tpu as pltpu


def _nap_kernel(x_ref, w1t_ref, params_ref, c_ref, o_ref):
    # x_ref      : (tb, H)  row tile of flattened inputs
    # w1t_ref    : (H, H)   first Linear weight, pre-transposed to (in, out)
    # params_ref : (8, H)   f32; row 0 = b1, row 1 = gamma * w2
    # c_ref      : (1,)     SMEM f32 scalar: sum(beta * w2) + b2
    # o_ref      : (1, tb)  lane-dense output row
    x = x_ref[...]
    w1t = w1t_ref[...]
    b1 = params_ref[0:1, :]        # (1, H)
    w2g = params_ref[1:2, :]       # (1, H) = gamma * w2

    # Linear(H,H): MXU matmul, f32 accumulation (inputs may be bf16).
    h = jnp.dot(x.astype(w1t.dtype), w1t, preferred_element_type=jnp.float32)
    h = jnp.maximum(h + b1, 0.0)   # bias + ReLU

    # LayerNorm(eps=1e-12) folded into the final Linear(H,1):
    #   hn = (h - mean) * rstd * gamma + beta
    #   y  = hn . w2 + b2 = rstd * ((h - mean) . (gamma*w2)) + (beta.w2 + b2)
    mean = jnp.mean(h, axis=-1, keepdims=True)      # (tb, 1)
    hc = h - mean
    var = jnp.mean(hc * hc, axis=-1)                # (tb,)
    d = jnp.sum(hc * w2g, axis=-1)                  # (tb,)
    y = d * lax.rsqrt(var + 1e-12) + c_ref[0]       # (tb,)

    # TODO(synk): nn.Dropout is identity in the eval-mode forward; add
    # pltpu.prng_seed/prng_random_bits masking for a training forward.

    # Lane-dense store: (tb,) -> (1, tb) row.
    o_ref[...] = y.reshape(1, y.shape[0]).astype(o_ref.dtype)


def _footprint_bytes(tb, H, x_itemsize, w_itemsize, w_buffers=1):
    return (w_buffers * H * H * w_itemsize      # resident W1^T
            + 2 * tb * H * x_itemsize           # double-buffered x tiles
            + w_buffers * 8 * H * 4             # packed params
            + 2 * tb * 4                        # double-buffered output rows
            + 3 * tb * H * 4)                   # f32 intermediates (h, hc, ...)


def next_action_prediction(x, w1, b1, gamma, beta, w2, b2, *,
                           tb=None, mxu_dtype=jnp.bfloat16):
    """Pallas forward of NextActionPrediction.

    x           : (..., H)
    w1, b1      : (H, H) [out, in], (H,)   -- first nn.Linear
    gamma, beta : (H,), (H,)               -- BertLayerNorm(eps=1e-12)
    w2, b2      : (1, H), (1,)             -- final nn.Linear(H, 1)
    mxu_dtype   : dtype fed to the MXU (bf16 default; None -> x.dtype)
    returns     : (..., 1)
    """
    *lead, H = x.shape
    x2 = x.reshape(-1, H)
    n = x2.shape[0]

    if mxu_dtype is None:
        mxu_dtype = x.dtype
    x_itemsize = jnp.dtype(x.dtype).itemsize
    w_itemsize = jnp.dtype(mxu_dtype).itemsize

    # VMEM budget: ~85% of physical capacity (64 MiB on v7x, 128 MiB v5e/v6e).
    try:
        cap = int(0.85 * pltpu.get_tpu_info().vmem_capacity_bytes)
    except Exception:
        cap = 100 << 20

    if tb is None:
        # Big lane-dense tiles: multiple of 128, up to 512 rows.
        tb = min(512, 128 * pl.cdiv(max(n, 1), 128))
        # v7x megacore: prefer an even number of row tiles.
        if tb == 512 and pl.cdiv(n, 512) % 2 == 1 and pl.cdiv(n, 256) % 2 == 0:
            tb = 256
        # Shrink until the footprint fits the VMEM budget.
        while tb > 128 and _footprint_bytes(tb, H, x_itemsize, w_itemsize) > cap:
            tb -= 128
    tb = max(8, ((tb + 7) // 8) * 8)

    n_pad = pl.cdiv(n, tb) * tb
    if n_pad != n:
        x2 = jnp.pad(x2, ((0, n_pad - n), (0, 0)))
    n_tiles = n_pad // tb

    # Wrapper-side layout plumbing (done once by XLA, not per tile).
    w1t = jnp.asarray(w1).T.astype(mxu_dtype)                 # (in, out)
    w2v = jnp.asarray(w2, jnp.float32).reshape(H)
    params = jnp.zeros((8, H), jnp.float32)
    params = params.at[0].set(jnp.asarray(b1, jnp.float32))
    params = params.at[1].set(jnp.asarray(gamma, jnp.float32) * w2v)
    c = (jnp.sum(jnp.asarray(beta, jnp.float32) * w2v)
         + jnp.asarray(b2, jnp.float32).reshape(()))
    c_arr = c.reshape(1)

    fp = _footprint_bytes(tb, H, x_itemsize, w_itemsize)
    vmem_limit = int(min(cap, max(2 * fp, 32 << 20)))

    def call(single_buffer_consts):
        const_kw = ({"pipeline_mode": pl.Buffered(1)}
                    if single_buffer_consts else {})
        return pl.pallas_call(
            _nap_kernel,
            out_shape=jax.ShapeDtypeStruct((n_tiles, tb), x.dtype),
            grid_spec=pltpu.PrefetchScalarGridSpec(
                num_scalar_prefetch=0,
                grid=(n_tiles,),
                in_specs=[
                    pl.BlockSpec((tb, H), lambda i: (i, 0)),             # x tiles
                    pl.BlockSpec((H, H), lambda i: (0, 0), **const_kw),  # W1^T
                    pl.BlockSpec((8, H), lambda i: (0, 0), **const_kw),  # params
                    pl.BlockSpec(memory_space=pltpu.MemorySpace.SMEM),   # c scalar
                ],
                out_specs=pl.BlockSpec((1, tb), lambda i: (i, 0)),
            ),
            compiler_params=pltpu.CompilerParams(
                dimension_semantics=("parallel",),
                vmem_limit_bytes=vmem_limit,
            ),
        )(x2, w1t, params, c_arr)

    # TODO(synk): for very large H (f32 W1^T >= ~32 MiB) add a second grid axis
    # tiling W1^T's output columns with a persistent (tb, H) VMEM accumulator.
    try:
        out = call(True)        # single-buffer the resident constants
    except Exception:
        out = call(False)       # fallback: JAX without BlockSpec pipeline_mode

    out = out.reshape(-1)[:n]
    return out.reshape(*lead, 1)


def next_action_prediction_ref(x, w1, b1, gamma, beta, w2, b2):
    h = x @ w1.T + b1
    h = jnp.maximum(h, 0.0)
    mean = jnp.mean(h, axis=-1, keepdims=True)
    var = jnp.mean((h - mean) ** 2, axis=-1, keepdims=True)
    hn = (h - mean) / jnp.sqrt(var + 1e-12)
    hn = hn * gamma + beta
    return hn @ w2.T + b2


if __name__ == "__main__":
    B, S, H = 2, 8, 32
    key = jax.random.PRNGKey(0)
    k_x, k_w1, k_b1, k_g, k_be, k_w2, k_b2 = jax.random.split(key, 7)

    x = jax.random.normal(k_x, (B, S, H), dtype=jnp.float32)

    bound1 = 1.0 / (H ** 0.5)
    w1 = jax.random.uniform(k_w1, (H, H), minval=-bound1, maxval=bound1,
                            dtype=jnp.float32)
    b1 = jax.random.uniform(k_b1, (H,), minval=-bound1, maxval=bound1,
                            dtype=jnp.float32)
    gamma = 1.0 + 0.1 * jax.random.normal(k_g, (H,), dtype=jnp.float32)
    beta = 0.1 * jax.random.normal(k_be, (H,), dtype=jnp.float32)
    w2 = jax.random.uniform(k_w2, (1, H), minval=-bound1, maxval=bound1,
                            dtype=jnp.float32)
    b2 = jax.random.uniform(k_b2, (1,), minval=-bound1, maxval=bound1,
                            dtype=jnp.float32)

    ref = next_action_prediction_ref(x, w1, b1, gamma, beta, w2, b2)

    # Exact-precision path (f32 MXU feed) -- tight tolerance vs f32 reference.
    out_f32 = jax.block_until_ready(
        next_action_prediction(x, w1, b1, gamma, beta, w2, b2,
                               mxu_dtype=jnp.float32))
    assert out_f32.shape == (B, S, 1), out_f32.shape
    assert jnp.allclose(out_f32, ref, atol=1e-4, rtol=1e-4), float(
        jnp.max(jnp.abs(out_f32 - ref)))

    # Default fast path (bf16 MXU feed, f32 accumulation / LayerNorm math).
    out_bf16 = jax.block_until_ready(
        next_action_prediction(x, w1, b1, gamma, beta, w2, b2))
    assert out_bf16.shape == (B, S, 1), out_bf16.shape
    assert jnp.allclose(out_bf16, ref, atol=5e-2, rtol=5e-2), float(
        jnp.max(jnp.abs(out_bf16 - ref)))

    print("KERNEL_OK")
</pallas_src>

<mosaic_0001>
module attributes {stable_mosaic.version = 11 : i64} {
  func.func @_nap_kernel(%arg0: i32, %arg1: memref<128x32xf32, #tpu.memory_space<vmem>>, %arg2: memref<32x32xf32, #tpu.memory_space<vmem>>, %arg3: memref<8x32xf32, #tpu.memory_space<vmem>>, %arg4: memref<1xf32, #tpu.memory_space<smem>>, %arg5: memref<1x128xf32, #tpu.memory_space<vmem>>) attributes {dimension_semantics = [#tpu.dimension_semantics<parallel>], iteration_bounds = array<i64: 1>, scalar_prefetch = 0 : i64, scratch_operands = 0 : i64, tpu.core_type = #tpu.core_type<tc>, window_params = [{transform_indices = @transform_0, window_bounds = array<i64: 128, 32>}, {pipeline_mode = #tpu.pipeline_mode<synchronous>, transform_indices = @transform_1, window_bounds = array<i64: 32, 32>}, {pipeline_mode = #tpu.pipeline_mode<synchronous>, transform_indices = @transform_2, window_bounds = array<i64: 8, 32>}, {transform_indices = @transform_3, window_bounds = array<i64: 1>}, {transform_indices = @transform_4, window_bounds = array<i64: 1, 128>}]} {
    %c0 = arith.constant 0 : index
    %c0_0 = arith.constant 0 : index
    %0 = vector.load %arg1[%c0, %c0_0] : memref<128x32xf32, #tpu.memory_space<vmem>>, vector<128x32xf32>
    %c0_1 = arith.constant 0 : index
    %c0_2 = arith.constant 0 : index
    %1 = vector.load %arg2[%c0_1, %c0_2] : memref<32x32xf32, #tpu.memory_space<vmem>>, vector<32x32xf32>
    %c0_3 = arith.constant 0 : index
    %c0_4 = arith.constant 0 : index
    %2 = vector.load %arg3[%c0_3, %c0_4] : memref<8x32xf32, #tpu.memory_space<vmem>>, vector<1x32xf32>
    %c1 = arith.constant 1 : index
    %c0_5 = arith.constant 0 : index
    %3 = vector.load %arg3[%c1, %c0_5] : memref<8x32xf32, #tpu.memory_space<vmem>>, vector<1x32xf32>
    %cst = arith.constant dense<0.000000e+00> : vector<128x32xf32>
    %4 = tpu.matmul %0, %1, %cst {dimension_numbers = #tpu.dot_dimension_numbers<[1], [0], [0], [1], [0, 0, 1, 1], [], []>} : vector<128x32xf32>, vector<32x32xf32>, vector<128x32xf32> -> vector<128x32xf32>
    %5 = vector.broadcast %2 : vector<1x32xf32> to vector<128x32xf32>
    %6 = arith.addf %4, %5 : vector<128x32xf32>
    %cst_6 = arith.constant 0.000000e+00 : f32
    %7 = vector.broadcast %cst_6 : f32 to vector<128x32xf32>
    %8 = arith.maximumf %6, %7 : vector<128x32xf32>
    %cst_7 = arith.constant dense<0.000000e+00> : vector<128xf32>
    %9 = vector.multi_reduction <add>, %8, %cst_7 [1] : vector<128x32xf32> to vector<128xf32>
    %10 = vector.shape_cast %9 : vector<128xf32> to vector<128x1xf32>
    %cst_8 = arith.constant 3.200000e+01 : f32
    %11 = vector.broadcast %cst_8 : f32 to vector<128x1xf32>
    %12 = arith.divf %10, %11 : vector<128x1xf32>
    %13 = vector.broadcast %12 : vector<128x1xf32> to vector<128x32xf32>
    %14 = arith.subf %8, %13 : vector<128x32xf32>
    %15 = arith.mulf %14, %14 : vector<128x32xf32>
    %cst_9 = arith.constant dense<0.000000e+00> : vector<128xf32>
    %16 = vector.multi_reduction <add>, %15, %cst_9 [1] : vector<128x32xf32> to vector<128xf32>
    %cst_10 = arith.constant 3.200000e+01 : f32
    %17 = vector.broadcast %cst_10 : f32 to vector<128xf32>
    %18 = arith.divf %16, %17 : vector<128xf32>
    %19 = vector.broadcast %3 : vector<1x32xf32> to vector<128x32xf32>
    %20 = arith.mulf %14, %19 : vector<128x32xf32>
    %cst_11 = arith.constant dense<0.000000e+00> : vector<128xf32>
    %21 = vector.multi_reduction <add>, %20, %cst_11 [1] : vector<128x32xf32> to vector<128xf32>
    %cst_12 = arith.constant 9.99999996E-13 : f32
    %22 = vector.broadcast %cst_12 : f32 to vector<128xf32>
    %23 = arith.addf %18, %22 : vector<128xf32>
    %24 = math.rsqrt %23 : vector<128xf32>
    %25 = arith.mulf %21, %24 : vector<128xf32>
    %c0_13 = arith.constant 0 : index
    %26 = memref.load %arg4[%c0_13] : memref<1xf32, #tpu.memory_space<smem>>
    %27 = vector.broadcast %26 : f32 to vector<128xf32>
    %28 = arith.addf %25, %27 : vector<128xf32>
    %29 = vector.shape_cast %28 : vector<128xf32> to vector<1x128xf32>
    %c0_14 = arith.constant 0 : index
    %c0_15 = arith.constant 0 : index
    %30 = vector.load %arg5[%c0_14, %c0_15] : memref<1x128xf32, #tpu.memory_space<vmem>>, vector<1x128xf32>
    tpu.vector_store %arg5[%c0_14, %c0_15], %29 {strides = array<i32>} : memref<1x128xf32, #tpu.memory_space<vmem>>, vector<1x128xf32>,
    return
  }
  func.func @transform_0(%arg0: i32) -> (i32, i32) {
    %c0_i32 = arith.constant 0 : i32
    %c0_i32_0 = arith.constant 0 : i32
    return %arg0, %c0_i32 : i32, i32
  }
  func.func @transform_1(%arg0: i32) -> (i32, i32) {
    %c0_i32 = arith.constant 0 : i32
    %c0_i32_0 = arith.constant 0 : i32
    %c0_i32_1 = arith.constant 0 : i32
    return %c0_i32, %c0_i32_0 : i32, i32
  }
  func.func @transform_2(%arg0: i32) -> (i32, i32) {
    %c0_i32 = arith.constant 0 : i32
    %c0_i32_0 = arith.constant 0 : i32
    %c0_i32_1 = arith.constant 0 : i32
    return %c0_i32, %c0_i32_0 : i32, i32
  }
  func.func @transform_3(%arg0: i32) -> i32 {
    %c0_i32 = arith.constant 0 : i32
    %c0_i32_0 = arith.constant 0 : i32
    return %c0_i32 : i32
  }
  func.func @transform_4(%arg0: i32) -> (i32, i32) {
    %c0_i32 = arith.constant 0 : i32
    %c0_i32_0 = arith.constant 0 : i32
    return %arg0, %c0_i32 : i32, i32
  }
}

module attributes {stable_mosaic.version = 11 : i64} {
  func.func @_nap_kernel(%arg0: i32, %arg1: memref<128x32xf32, #tpu.memory_space<vmem>>, %arg2: memref<32x32xf32, #tpu.memory_space<vmem>>, %arg3: memref<8x32xf32, #tpu.memory_space<vmem>>, %arg4: memref<1xf32, #tpu.memory_space<smem>>, %arg5: memref<1x128xf32, #tpu.memory_space<vmem>>) attributes {dimension_semantics = [#tpu.dimension_semantics<parallel>], iteration_bounds = array<i64: 1>, scalar_prefetch = 0 : i64, scratch_operands = 0 : i64, tpu.core_type = #tpu.core_type<tc>, window_params = [{transform_indices = @transform_0, window_bounds = array<i64: 128, 32>}, {pipeline_mode = #tpu.pipeline_mode<synchronous>, transform_indices = @transform_1, window_bounds = array<i64: 32, 32>}, {pipeline_mode = #tpu.pipeline_mode<synchronous>, transform_indices = @transform_2, window_bounds = array<i64: 8, 32>}, {transform_indices = @transform_3, window_bounds = array<i64: 1>}, {transform_indices = @transform_4, window_bounds = array<i64: 1, 128>}]} {
    %c0 = arith.constant 0 : index
    %c0_0 = arith.constant 0 : index
    %0 = vector.load %arg1[%c0, %c0_0] : memref<128x32xf32, #tpu.memory_space<vmem>>, vector<128x32xf32>
    %c0_1 = arith.constant 0 : index
    %c0_2 = arith.constant 0 : index
    %1 = vector.load %arg2[%c0_1, %c0_2] : memref<32x32xf32, #tpu.memory_space<vmem>>, vector<32x32xf32>
    %c0_3 = arith.constant 0 : index
    %c0_4 = arith.constant 0 : index
    %2 = vector.load %arg3[%c0_3, %c0_4] : memref<8x32xf32, #tpu.memory_space<vmem>>, vector<1x32xf32>
    %c1 = arith.constant 1 : index
    %c0_5 = arith.constant 0 : index
    %3 = vector.load %arg3[%c1, %c0_5] : memref<8x32xf32, #tpu.memory_space<vmem>>, vector<1x32xf32>
    %cst = arith.constant dense<0.000000e+00> : vector<128x32xf32>
    %4 = tpu.matmul %0, %1, %cst {dimension_numbers = #tpu.dot_dimension_numbers<[1], [0], [0], [1], [0, 0, 1, 1], [], []>} : vector<128x32xf32>, vector<32x32xf32>, vector<128x32xf32> -> vector<128x32xf32>
    %5 = vector.broadcast %2 : vector<1x32xf32> to vector<128x32xf32>
    %6 = arith.addf %4, %5 : vector<128x32xf32>
    %cst_6 = arith.constant 0.000000e+00 : f32
    %7 = vector.broadcast %cst_6 : f32 to vector<128x32xf32>
    %8 = arith.maximumf %6, %7 : vector<128x32xf32>
    %cst_7 = arith.constant dense<0.000000e+00> : vector<128xf32>
    %9 = vector.multi_reduction <add>, %8, %cst_7 [1] : vector<128x32xf32> to vector<128xf32>
    %10 = vector.shape_cast %9 : vector<128xf32> to vector<128x1xf32>
    %cst_8 = arith.constant 3.200000e+01 : f32
    %11 = vector.broadcast %cst_8 : f32 to vector<128x1xf32>
    %12 = arith.divf %10, %11 : vector<128x1xf32>
    %13 = vector.broadcast %12 : vector<128x1xf32> to vector<128x32xf32>
    %14 = arith.subf %8, %13 : vector<128x32xf32>
    %15 = arith.mulf %14, %14 : vector<128x32xf32>
    %cst_9 = arith.constant dense<0.000000e+00> : vector<128xf32>
    %16 = vector.multi_reduction <add>, %15, %cst_9 [1] : vector<128x32xf32> to vector<128xf32>
    %cst_10 = arith.constant 3.200000e+01 : f32
    %17 = vector.broadcast %cst_10 : f32 to vector<128xf32>
    %18 = arith.divf %16, %17 : vector<128xf32>
    %19 = vector.broadcast %3 : vector<1x32xf32> to vector<128x32xf32>
    %20 = arith.mulf %14, %19 : vector<128x32xf32>
    %cst_11 = arith.constant dense<0.000000e+00> : vector<128xf32>
    %21 = vector.multi_reduction <add>, %20, %cst_11 [1] : vector<128x32xf32> to vector<128xf32>
    %cst_12 = arith.constant 9.99999996E-13 : f32
    %22 = vector.broadcast %cst_12 : f32 to vector<128xf32>
    %23 = arith.addf %18, %22 : vector<128xf32>
    %24 = math.rsqrt %23 : vector<128xf32>
    %25 = arith.mulf %21, %24 : vector<128xf32>
    %c0_13 = arith.constant 0 : index
    %26 = memref.load %arg4[%c0_13] : memref<1xf32, #tpu.memory_space<smem>>
    %27 = vector.broadcast %26 : f32 to vector<128xf32>
    %28 = arith.addf %25, %27 : vector<128xf32>
    %29 = vector.shape_cast %28 : vector<128xf32> to vector<1x128xf32>
    %c0_14 = arith.constant 0 : index
    %c0_15 = arith.constant 0 : index
    %30 = vector.load %arg5[%c0_14, %c0_15] : memref<1x128xf32, #tpu.memory_space<vmem>>, vector<1x128xf32>
    tpu.vector_store %arg5[%c0_14, %c0_15], %29 {strides = array<i32>} : memref<1x128xf32, #tpu.memory_space<vmem>>, vector<1x128xf32>,
    return
  }
  func.func @transform_0(%arg0: i32) -> (i32, i32) {
    %c0_i32 = arith.constant 0 : i32
    %c0_i32_0 = arith.constant 0 : i32
    return %arg0, %c0_i32 : i32, i32
  }
  func.func @transform_1(%arg0: i32) -> (i32, i32) {
    %c0_i32 = arith.constant 0 : i32
    %c0_i32_0 = arith.constant 0 : i32
    %c0_i32_1 = arith.constant 0 : i32
    return %c0_i32, %c0_i32_0 : i32, i32
  }
  func.func @transform_2(%arg0: i32) -> (i32, i32) {
    %c0_i32 = arith.constant 0 : i32
    %c0_i32_0 = arith.constant 0 : i32
    %c0_i32_1 = arith.constant 0 : i32
    return %c0_i32, %c0_i32_0 : i32, i32
  }
  func.func @transform_3(%arg0: i32) -> i32 {
    %c0_i32 = arith.constant 0 : i32
    %c0_i32_0 = arith.constant 0 : i32
    return %c0_i32 : i32
  }
  func.func @transform_4(%arg0: i32) -> (i32, i32) {
    %c0_i32 = arith.constant 0 : i32
    %c0_i32_0 = arith.constant 0 : i32
    return %arg0, %c0_i32 : i32, i32
  }
}

</mosaic_0001>

<llo_original>
// kernel: tpu_custom_call.1
$region0: #{tpu_custom_call.1}
  #allocation0 [shape = 'u32[]', space=smem, size = 0x4, offset = 0x4, fixed_abs, tag = 'smem constant byte address 0x4 - core index']
  #allocation1 [shape = 'u32[144,128]{1,0:T(1,128)}', space=vmem, size = 0x12000, scoped, tag = 'internal scratch']
  #allocation2 [shape = 'f32[1]{0:T(128)S(6)}', space=smem, size = 0x200, scoped, tag = 'scoped memory for tpu_custom_call.1']
  %s0 = inlined_call_operand.vmem [shape: f32[128,32], index: 0, kind: input, shape index: {}]
  %s1 = inlined_call_operand.vmem [shape: f32[32,32], index: 1, kind: input, shape index: {}]
  %s2 = inlined_call_operand.vmem [shape: f32[8,32], index: 2, kind: input, shape index: {}]
  %s3 = inlined_call_operand.<no memory space> [shape: f32[1], index: 3, kind: input, shape index: {}]
  %s4 = inlined_call_operand.hbm [shape: f32[1,128], index: 4, kind: output, shape index: {}]
  %s5 = sld [smem:[#allocation0]]
  $region26: #{tpu_custom_call.1} parent=0
    _
  %s7 = ssub.s32 1, %s5
  %s8 = scalar_select 0, %s7, %s5
  %9 = sst [smem:[#allocation2]] %s3
  $region1: #{tpu_custom_call.1} parent=0
    #allocation3 [shape = 'u8[512]{0}', space=vmem, size = 0x400, scoped, tag = 'output window, operand 0, single buffered']
    #allocation4 [shape = 's32[1]{0}', space=sflag, size = 0x4, scoped, tag = 'scoped memory for tpu_custom_call.1']
    %10 = vsyncpa [#allocation4], 0
    // Predicated region
    $region2: #{tpu_custom_call.1} parent=1 // pred_check
      _
    $region3: #{tpu_custom_call.1} parent=1 // pred_check_branch
      %12 = sbr.rel (0) target = $region5
    $region4: #{tpu_custom_call.1} parent=1 // pred_region
      _
    $region5: #{tpu_custom_call.1} parent=1 // pred_fallthru
      _
    // Predicated region
    $region6: #{tpu_custom_call.1} parent=1 // pred_check
      _
    $region7: #{tpu_custom_call.1} parent=1 // pred_check_branch
      %14 = sbr.rel (0) target = $region9
    $region8: #{tpu_custom_call.1} parent=1 // pred_region
      _
    $region9: #{tpu_custom_call.1} parent=1 // pred_fallthru
      _
    // Predicated region
    $region10: #{tpu_custom_call.1} parent=1 // pred_check
      _
    $region11: #{tpu_custom_call.1} parent=1 // pred_check_branch
      %16 = sbr.rel (0) target = $region13
    $region12: #{tpu_custom_call.1} parent=1 // pred_region
      _
    $region13: #{tpu_custom_call.1} parent=1 // pred_fallthru
      _
    // Predicated region
    $region14: #{tpu_custom_call.1} parent=1 // pred_check
      _
    $region15: #{tpu_custom_call.1} parent=1 // pred_check_branch
      %18 = sbr.rel (0) target = $region17
    $region16: #{tpu_custom_call.1} parent=1 // pred_region
      _
    $region17: #{tpu_custom_call.1} parent=1 // pred_fallthru
      _
    %v19 = vld [vmem:[%s0] sm:$0xff]
    %v20 = vld [vmem:[%s0 + $0x8] sm:$0xff]
    %v21 = vld [vmem:[%s0 + $0x10] sm:$0xff]
    %v22 = vld [vmem:[%s0 + $0x18] sm:$0xff]
    %v23 = vld [vmem:[%s0 + $0x20] sm:$0xff]
    %v24 = vld [vmem:[%s0 + $0x28] sm:$0xff]
    %v25 = vld [vmem:[%s0 + $0x30] sm:$0xff]
    %v26 = vld [vmem:[%s0 + $0x38] sm:$0xff]
    %v27 = vld [vmem:[%s0 + $0x40] sm:$0xff]
    %v28 = vld [vmem:[%s0 + $0x48] sm:$0xff]
    %v29 = vld [vmem:[%s0 + $0x50] sm:$0xff]
    %v30 = vld [vmem:[%s0 + $0x58] sm:$0xff]
    %v31 = vld [vmem:[%s0 + $0x60] sm:$0xff]
    %v32 = vld [vmem:[%s0 + $0x68] sm:$0xff]
    %v33 = vld [vmem:[%s0 + $0x70] sm:$0xff]
    %v34 = vld [vmem:[%s0 + $0x78] sm:$0xff]
    %v35 = vld [vmem:[%s1] sm:$0xff]
    %v36 = vld [vmem:[%s1 + $0x8] sm:$0xff]
    %v37 = vld [vmem:[%s1 + $0x10] sm:$0xff]
    %v38 = vld [vmem:[%s1 + $0x18] sm:$0xff]
    %v39 = vld [vmem:[%s2] sm:$0x1]
    %v40 = vld [vmem:[%s2 + $0x1] sm:$0x1]
    %v41 = vlaneseq
    %v42 = vshrl.u32 %v41, 7
    %v43 = vsub.s32 0, %v42
    %v44 = vrot.slane %v39, %v43
    %vm45 = vcmask 261120
    %v47 = vsel %vm45, %v19, 0
    %v50 = vsel %vm45, %v20, 0
    %v53 = vsel %vm45, %v21, 0
    %v56 = vsel %vm45, %v22, 0
    %v59 = vsel %vm45, %v23, 0
    %v62 = vsel %vm45, %v24, 0
    %v65 = vsel %vm45, %v25, 0
    %v68 = vsel %vm45, %v26, 0
    %v71 = vsel %vm45, %v27, 0
    %v74 = vsel %vm45, %v28, 0
    %v77 = vsel %vm45, %v29, 0
    %v80 = vsel %vm45, %v30, 0
    %v83 = vsel %vm45, %v31, 0
    %v86 = vsel %vm45, %v32, 0
    %v89 = vsel %vm45, %v33, 0
    %v92 = vsel %vm45, %v34, 0
    %94 = vmatprep.subr.mxu0 0.0
    %95 = vmatpush1.msra.mxu0 0.0
    %96 = vmatprep.subr.mxu0 0.0
    %97 = vmatpush1.msra.mxu0 0.0
    %98 = vmatprep.subr.mxu0 0.0
    %99 = vmatpush1.msra.mxu0 0.0
    %100 = vmatprep.subr.mxu0 0.0
    %101 = vmatpush1.msra.mxu0 0.0
    %102 = vmatprep.subr.mxu0 0.0
    %103 = vmatpush1.msra.mxu0 0.0
    %104 = vmatprep.subr.mxu0 0.0
    %105 = vmatpush1.msra.mxu0 0.0
    %106 = vmatprep.subr.mxu0 0.0
    %107 = vmatpush1.msra.mxu0 0.0
    %108 = vmatprep.subr.mxu0 0.0
    %109 = vmatpush1.msra.mxu0 0.0
    %110 = vmatprep.subr.mxu0 0.0
    %111 = vmatpush1.msra.mxu0 0.0
    %112 = vmatprep.subr.mxu0 0.0
    %113 = vmatpush1.msra.mxu0 0.0
    %114 = vmatprep.subr.mxu0 0.0
    %115 = vmatpush1.msra.mxu0 0.0
    %116 = vmatprep.subr.mxu0 0.0
    %117 = vmatpush1.msra.mxu0 0.0
    %118 = vmatprep.subr.mxu0 0.0
    %119 = vmatpush1.msra.mxu0 %v38
    %120 = vmatprep.subr.mxu0 0.0
    %121 = vmatpush1.msra.mxu0 %v37
    %122 = vmatprep.subr.mxu0 0.0
    %123 = vmatpush1.msra.mxu0 %v36
    %124 = vmatprep.subr.mxu0 0.0
    %125 = vmatpush1.msra.mxu0 %v35
    %126 = vmatprep.subr.mxu0 0.0
    %127 = vmatpush2.msra.mxu0 0.0
    %128 = vmatprep.subr.mxu0 0.0
    %129 = vmatpush2.msra.mxu0 0.0
    %130 = vmatprep.subr.mxu0 0.0
    %131 = vmatpush2.msra.mxu0 0.0
    %132 = vmatprep.subr.mxu0 0.0
    %133 = vmatpush2.msra.mxu0 0.0
    %134 = vmatprep.subr.mxu0 0.0
    %135 = vmatpush2.msra.mxu0 0.0
    %136 = vmatprep.subr.mxu0 0.0
    %137 = vmatpush2.msra.mxu0 0.0
    %138 = vmatprep.subr.mxu0 0.0
    %139 = vmatpush2.msra.mxu0 0.0
    %140 = vmatprep.subr.mxu0 0.0
    %141 = vmatpush2.msra.mxu0 0.0
    %142 = vmatprep.subr.mxu0 0.0
    %143 = vmatpush2.msra.mxu0 0.0
    %144 = vmatprep.subr.mxu0 0.0
    %145 = vmatpush2.msra.mxu0 0.0
    %146 = vmatprep.subr.mxu0 0.0
    %147 = vmatpush2.msra.mxu0 0.0
    %148 = vmatprep.subr.mxu0 0.0
    %149 = vmatpush2.msra.mxu0 0.0
    %150 = vmatprep.subr.mxu0 0.0
    %151 = vmatpush2.msra.mxu0 0.0
    %152 = vmatprep.subr.mxu0 0.0
    %153 = vmatpush2.msra.mxu0 0.0
    %154 = vmatprep.subr.mxu0 0.0
    %155 = vmatpush2.msra.mxu0 0.0
    %156 = vmatprep.subr.mxu0 0.0
    %157 = vmatpush2.msra.mxu0 0.0
    %158 = vmatprep.mubr.f32.mxu0 0.0
    %159 = vmatmul.mubr.f32.gmra.mxu0 %v47
    %v160 = vpop.f32.mrf.mxu0
    %v161 = vadd.f32 %v44, %v160
    %v162 = vpop.f32.mrf.mxu0
    %163 = vmatprep.mubr.f32.mxu0 0.0
    %164 = vmatmul.mubr.f32.gmra.mxu0 %v50
    %v165 = vpop.f32.mrf.mxu0
    %v166 = vadd.f32 %v44, %v165
    %v167 = vpop.f32.mrf.mxu0
    %168 = vmatprep.mubr.f32.mxu0 0.0
    %169 = vmatmul.mubr.f32.gmra.mxu0 %v53
    %v170 = vpop.f32.mrf.mxu0
    %v171 = vadd.f32 %v44, %v170
    %v172 = vpop.f32.mrf.mxu0
    %173 = vmatprep.mubr.f32.mxu0 0.0
    %174 = vmatmul.mubr.f32.gmra.mxu0 %v56
    %v175 = vpop.f32.mrf.mxu0
    %v176 = vadd.f32 %v44, %v175
    %v177 = vpop.f32.mrf.mxu0
    %178 = vmatprep.mubr.f32.mxu0 0.0
    %179 = vmatmul.mubr.f32.gmra.mxu0 %v59
    %v180 = vpop.f32.mrf.mxu0
    %v181 = vadd.f32 %v44, %v180
    %v182 = vpop.f32.mrf.mxu0
    %183 = vmatprep.mubr.f32.mxu0 0.0
    %184 = vmatmul.mubr.f32.gmra.mxu0 %v62
    %v185 = vpop.f32.mrf.mxu0
    %v186 = vadd.f32 %v44, %v185
    %v187 = vpop.f32.mrf.mxu0
    %188 = vmatprep.mubr.f32.mxu0 0.0
    %189 = vmatmul.mubr.f32.gmra.mxu0 %v65
    %v190 = vpop.f32.mrf.mxu0
    %v191 = vadd.f32 %v44, %v190
    %v192 = vpop.f32.mrf.mxu0
    %193 = vmatprep.mubr.f32.mxu0 0.0
    %194 = vmatmul.mubr.f32.gmra.mxu0 %v68
    %v195 = vpop.f32.mrf.mxu0
    %v196 = vadd.f32 %v44, %v195
    %v197 = vpop.f32.mrf.mxu0
    %198 = vmatprep.mubr.f32.mxu0 0.0
    %199 = vmatmul.mubr.f32.gmra.mxu0 %v71
    %v200 = vpop.f32.mrf.mxu0
    %v201 = vadd.f32 %v44, %v200
    %v202 = vpop.f32.mrf.mxu0
    %203 = vmatprep.mubr.f32.mxu0 0.0
    %204 = vmatmul.mubr.f32.gmra.mxu0 %v74
    %v205 = vpop.f32.mrf.mxu0
    %v206 = vadd.f32 %v44, %v205
    %v207 = vpop.f32.mrf.mxu0
    %208 = vmatprep.mubr.f32.mxu0 0.0
    %209 = vmatmul.mubr.f32.gmra.mxu0 %v77
    %v210 = vpop.f32.mrf.mxu0
    %v211 = vadd.f32 %v44, %v210
    %v212 = vpop.f32.mrf.mxu0
    %213 = vmatprep.mubr.f32.mxu0 0.0
    %214 = vmatmul.mubr.f32.gmra.mxu0 %v80
    %v215 = vpop.f32.mrf.mxu0
    %v216 = vadd.f32 %v44, %v215
    %v217 = vpop.f32.mrf.mxu0
    %218 = vmatprep.mubr.f32.mxu0 0.0
    %219 = vmatmul.mubr.f32.gmra.mxu0 %v83
    %v220 = vpop.f32.mrf.mxu0
    %v221 = vadd.f32 %v44, %v220
    %v222 = vpop.f32.mrf.mxu0
    %223 = vmatprep.mubr.f32.mxu0 0.0
    %224 = vmatmul.mubr.f32.gmra.mxu0 %v86
    %v225 = vpop.f32.mrf.mxu0
    %v226 = vadd.f32 %v44, %v225
    %v227 = vpop.f32.mrf.mxu0
    %228 = vmatprep.mubr.f32.mxu0 0.0
    %229 = vmatmul.mubr.f32.gmra.mxu0 %v89
    %v230 = vpop.f32.mrf.mxu0
    %v231 = vadd.f32 %v44, %v230
    %v232 = vpop.f32.mrf.mxu0
    %233 = vmatprep.mubr.f32.mxu0 0.0
    %234 = vmatmul.mubr.f32.gmra.mxu0 %v92
    %v235 = vpop.f32.mrf.mxu0
    %v236 = vadd.f32 %v44, %v235
    %v237 = vpop.f32.mrf.mxu0
    %238 = vdwg.mxu0
    %v239 = vmax.f32 %v161, 0.0
    %v240 = vmax.f32 %v166, 0.0
    %v241 = vmax.f32 %v171, 0.0
    %v242 = vmax.f32 %v176, 0.0
    %v243 = vmax.f32 %v181, 0.0
    %v244 = vmax.f32 %v186, 0.0
    %v245 = vmax.f32 %v191, 0.0
    %v246 = vmax.f32 %v196, 0.0
    %v247 = vmax.f32 %v201, 0.0
    %v248 = vmax.f32 %v206, 0.0
    %v249 = vmax.f32 %v211, 0.0
    %v250 = vmax.f32 %v216, 0.0
    %v251 = vmax.f32 %v221, 0.0
    %v252 = vmax.f32 %v226, 0.0
    %v253 = vmax.f32 %v231, 0.0
    %v254 = vmax.f32 %v236, 0.0
    %v255 = vsel %vm45, %v239, 0.0
    %256 = vadd.xlane.f32.xlu0 %v255
    %v257 = vpop.xlane.xlu0 %256
    %v258 = vsel %vm45, %v240, 0.0
    %259 = vadd.xlane.f32.xlu0 %v258
    %v260 = vpop.xlane.xlu0 %259
    %v261 = vsel %vm45, %v241, 0.0
    %262 = vadd.xlane.f32.xlu0 %v261
    %v263 = vpop.xlane.xlu0 %262
    %v264 = vsel %vm45, %v242, 0.0
    %265 = vadd.xlane.f32.xlu0 %v264
    %v266 = vpop.xlane.xlu0 %265
    %v267 = vsel %vm45, %v243, 0.0
    %268 = vadd.xlane.f32.xlu0 %v267
    %v269 = vpop.xlane.xlu0 %268
    %v270 = vsel %vm45, %v244, 0.0
    %271 = vadd.xlane.f32.xlu0 %v270
    %v272 = vpop.xlane.xlu0 %271
    %v273 = vsel %vm45, %v245, 0.0
    %274 = vadd.xlane.f32.xlu0 %v273
    %v275 = vpop.xlane.xlu0 %274
    %v276 = vsel %vm45, %v246, 0.0
    %277 = vadd.xlane.f32.xlu0 %v276
    %v278 = vpop.xlane.xlu0 %277
    %v279 = vsel %vm45, %v247, 0.0
    %280 = vadd.xlane.f32.xlu0 %v279
    %v281 = vpop.xlane.xlu0 %280
    %v282 = vsel %vm45, %v248, 0.0
    %283 = vadd.xlane.f32.xlu0 %v282
    %v284 = vpop.xlane.xlu0 %283
    %v285 = vsel %vm45, %v249, 0.0
    %286 = vadd.xlane.f32.xlu0 %v285
    %v287 = vpop.xlane.xlu0 %286
    %v288 = vsel %vm45, %v250, 0.0
    %289 = vadd.xlane.f32.xlu0 %v288
    %v290 = vpop.xlane.xlu0 %289
    %v291 = vsel %vm45, %v251, 0.0
    %292 = vadd.xlane.f32.xlu0 %v291
    %v293 = vpop.xlane.xlu0 %292
    %v294 = vsel %vm45, %v252, 0.0
    %295 = vadd.xlane.f32.xlu0 %v294
    %v296 = vpop.xlane.xlu0 %295
    %v297 = vsel %vm45, %v253, 0.0
    %298 = vadd.xlane.f32.xlu0 %v297
    %v299 = vpop.xlane.xlu0 %298
    %v300 = vsel %vm45, %v254, 0.0
    %301 = vadd.xlane.f32.xlu0 %v300
    %v302 = vpop.xlane.xlu0 %301
    %v303 = vrcp.pop 32.0
    %v304 = vmul.f32 %v257, %v303
    %v305 = vmul.f32 %v260, %v303
    %v306 = vmul.f32 %v263, %v303
    %v307 = vmul.f32 %v266, %v303
    %v308 = vmul.f32 %v269, %v303
    %v309 = vmul.f32 %v272, %v303
    %v310 = vmul.f32 %v275, %v303
    %v311 = vmul.f32 %v278, %v303
    %v312 = vmul.f32 %v281, %v303
    %v313 = vmul.f32 %v284, %v303
    %v314 = vmul.f32 %v287, %v303
    %v315 = vmul.f32 %v290, %v303
    %v316 = vmul.f32 %v293, %v303
    %v317 = vmul.f32 %v296, %v303
    %v318 = vmul.f32 %v299, %v303
    %v319 = vmul.f32 %v302, %v303
    %v320 = vsub.f32 %v239, %v304
    %v321 = vsub.f32 %v240, %v305
    %v322 = vsub.f32 %v241, %v306
    %v323 = vsub.f32 %v242, %v307
    %v324 = vsub.f32 %v243, %v308
    %v325 = vsub.f32 %v244, %v309
    %v326 = vsub.f32 %v245, %v310
    %v327 = vsub.f32 %v246, %v311
    %v328 = vsub.f32 %v247, %v312
    %v329 = vsub.f32 %v248, %v313
    %v330 = vsub.f32 %v249, %v314
    %v331 = vsub.f32 %v250, %v315
    %v332 = vsub.f32 %v251, %v316
    %v333 = vsub.f32 %v252, %v317
    %v334 = vsub.f32 %v253, %v318
    %v335 = vsub.f32 %v254, %v319
    %v336 = vmul.f32 %v320, %v320
    %v337 = vmul.f32 %v321, %v321
    %v338 = vmul.f32 %v322, %v322
    %v339 = vmul.f32 %v323, %v323
    %v340 = vmul.f32 %v324, %v324
    %v341 = vmul.f32 %v325, %v325
    %v342 = vmul.f32 %v326, %v326
    %v343 = vmul.f32 %v327, %v327
    %v344 = vmul.f32 %v328, %v328
    %v345 = vmul.f32 %v329, %v329
    %v346 = vmul.f32 %v330, %v330
    %v347 = vmul.f32 %v331, %v331
    %v348 = vmul.f32 %v332, %v332
    %v349 = vmul.f32 %v333, %v333
    %v350 = vmul.f32 %v334, %v334
    %v351 = vmul.f32 %v335, %v335
    %v352 = vsel %vm45, %v336, 0.0
    %353 = vadd.xlane.f32.xlu0 %v352
    %v354 = vpop.xlane.xlu0 %353
    %v355 = vsel %vm45, %v337, 0.0
    %356 = vadd.xlane.f32.xlu0 %v355
    %v357 = vpop.xlane.xlu0 %356
    %v358 = vsel %vm45, %v338, 0.0
    %359 = vadd.xlane.f32.xlu0 %v358
    %v360 = vpop.xlane.xlu0 %359
    %v361 = vsel %vm45, %v339, 0.0
    %362 = vadd.xlane.f32.xlu0 %v361
    %v363 = vpop.xlane.xlu0 %362
    %v364 = vsel %vm45, %v340, 0.0
    %365 = vadd.xlane.f32.xlu0 %v364
    %v366 = vpop.xlane.xlu0 %365
    %v367 = vsel %vm45, %v341, 0.0
    %368 = vadd.xlane.f32.xlu0 %v367
    %v369 = vpop.xlane.xlu0 %368
    %v370 = vsel %vm45, %v342, 0.0
    %371 = vadd.xlane.f32.xlu0 %v370
    %v372 = vpop.xlane.xlu0 %371
    %v373 = vsel %vm45, %v343, 0.0
    %374 = vadd.xlane.f32.xlu0 %v373
    %v375 = vpop.xlane.xlu0 %374
    %v376 = vsel %vm45, %v344, 0.0
    %377 = vadd.xlane.f32.xlu0 %v376
    %v378 = vpop.xlane.xlu0 %377
    %v379 = vsel %vm45, %v345, 0.0
    %380 = vadd.xlane.f32.xlu0 %v379
    %v381 = vpop.xlane.xlu0 %380
    %v382 = vsel %vm45, %v346, 0.0
    %383 = vadd.xlane.f32.xlu0 %v382
    %v384 = vpop.xlane.xlu0 %383
    %v385 = vsel %vm45, %v347, 0.0
    %386 = vadd.xlane.f32.xlu0 %v385
    %v387 = vpop.xlane.xlu0 %386
    %v388 = vsel %vm45, %v348, 0.0
    %389 = vadd.xlane.f32.xlu0 %v388
    %v390 = vpop.xlane.xlu0 %389
    %v391 = vsel %vm45, %v349, 0.0
    %392 = vadd.xlane.f32.xlu0 %v391
    %v393 = vpop.xlane.xlu0 %392
    %v394 = vsel %vm45, %v350, 0.0
    %395 = vadd.xlane.f32.xlu0 %v394
    %v396 = vpop.xlane.xlu0 %395
    %v397 = vsel %vm45, %v351, 0.0
    %398 = vadd.xlane.f32.xlu0 %v397
    %v399 = vpop.xlane.xlu0 %398
    %v400 = vmul.f32 %v354, %v303
    %v401 = vmul.f32 %v357, %v303
    %v402 = vmul.f32 %v360, %v303
    %v403 = vmul.f32 %v363, %v303
    %v404 = vmul.f32 %v366, %v303
    %v405 = vmul.f32 %v369, %v303
    %v406 = vmul.f32 %v372, %v303
    %v407 = vmul.f32 %v375, %v303
    %v408 = vmul.f32 %v378, %v303
    %v409 = vmul.f32 %v381, %v303
    %v410 = vmul.f32 %v384, %v303
    %v411 = vmul.f32 %v387, %v303
    %v412 = vmul.f32 %v390, %v303
    %v413 = vmul.f32 %v393, %v303
    %v414 = vmul.f32 %v396, %v303
    %v415 = vmul.f32 %v399, %v303
    %v416 = vlaneseq
    %v417 = vshrl.u32 %v416, 7
    %v418 = vsub.s32 0, %v417
    %v419 = vrot.slane %v40, %v418
    %v420 = vmul.f32 %v320, %v419
    %v421 = vmul.f32 %v321, %v419
    %v422 = vmul.f32 %v322, %v419
    %v423 = vmul.f32 %v323, %v419
    %v424 = vmul.f32 %v324, %v419
    %v425 = vmul.f32 %v325, %v419
    %v426 = vmul.f32 %v326, %v419
    %v427 = vmul.f32 %v327, %v419
    %v428 = vmul.f32 %v328, %v419
    %v429 = vmul.f32 %v329, %v419
    %v430 = vmul.f32 %v330, %v419
    %v431 = vmul.f32 %v331, %v419
    %v432 = vmul.f32 %v332, %v419
    %v433 = vmul.f32 %v333, %v419
    %v434 = vmul.f32 %v334, %v419
    %v435 = vmul.f32 %v335, %v419
    %v436 = vsel %vm45, %v420, 0.0
    %437 = vadd.xlane.f32.xlu0 %v436
    %v438 = vpop.xlane.xlu0 %437
    %v439 = vsel %vm45, %v421, 0.0
    %440 = vadd.xlane.f32.xlu0 %v439
    %v441 = vpop.xlane.xlu0 %440
    %v442 = vsel %vm45, %v422, 0.0
    %443 = vadd.xlane.f32.xlu0 %v442
    %v444 = vpop.xlane.xlu0 %443
    %v445 = vsel %vm45, %v423, 0.0
    %446 = vadd.xlane.f32.xlu0 %v445
    %v447 = vpop.xlane.xlu0 %446
    %v448 = vsel %vm45, %v424, 0.0
    %449 = vadd.xlane.f32.xlu0 %v448
    %v450 = vpop.xlane.xlu0 %449
    %v451 = vsel %vm45, %v425, 0.0
    %452 = vadd.xlane.f32.xlu0 %v451
    %v453 = vpop.xlane.xlu0 %452
    %v454 = vsel %vm45, %v426, 0.0
    %455 = vadd.xlane.f32.xlu0 %v454
    %v456 = vpop.xlane.xlu0 %455
    %v457 = vsel %vm45, %v427, 0.0
    %458 = vadd.xlane.f32.xlu0 %v457
    %v459 = vpop.xlane.xlu0 %458
    %v460 = vsel %vm45, %v428, 0.0
    %461 = vadd.xlane.f32.xlu0 %v460
    %v462 = vpop.xlane.xlu0 %461
    %v463 = vsel %vm45, %v429, 0.0
    %464 = vadd.xlane.f32.xlu0 %v463
    %v465 = vpop.xlane.xlu0 %464
    %v466 = vsel %vm45, %v430, 0.0
    %467 = vadd.xlane.f32.xlu0 %v466
    %v468 = vpop.xlane.xlu0 %467
    %v469 = vsel %vm45, %v431, 0.0
    %470 = vadd.xlane.f32.xlu0 %v469
    %v471 = vpop.xlane.xlu0 %470
    %v472 = vsel %vm45, %v432, 0.0
    %473 = vadd.xlane.f32.xlu0 %v472
    %v474 = vpop.xlane.xlu0 %473
    %v475 = vsel %vm45, %v433, 0.0
    %476 = vadd.xlane.f32.xlu0 %v475
    %v477 = vpop.xlane.xlu0 %476
    %v478 = vsel %vm45, %v434, 0.0
    %479 = vadd.xlane.f32.xlu0 %v478
    %v480 = vpop.xlane.xlu0 %479
    %v481 = vsel %vm45, %v435, 0.0
    %482 = vadd.xlane.f32.xlu0 %v481
    %v483 = vpop.xlane.xlu0 %482
    %v484 = vadd.f32 %v400, 1e-12
    %v485 = vadd.f32 %v401, 1e-12
    %v486 = vadd.f32 %v402, 1e-12
    %v487 = vadd.f32 %v403, 1e-12
    %v488 = vadd.f32 %v404, 1e-12
    %v489 = vadd.f32 %v405, 1e-12
    %v490 = vadd.f32 %v406, 1e-12
    %v491 = vadd.f32 %v407, 1e-12
    %v492 = vadd.f32 %v408, 1e-12
    %v493 = vadd.f32 %v409, 1e-12
    %v494 = vadd.f32 %v410, 1e-12
    %v495 = vadd.f32 %v411, 1e-12
    %v496 = vadd.f32 %v412, 1e-12
    %v497 = vadd.f32 %v413, 1e-12
    %v498 = vadd.f32 %v414, 1e-12
    %v499 = vadd.f32 %v415, 1e-12
    %v500 = vrsqrt.pop %v484
    %v501 = vrsqrt.pop %v485
    %v502 = vrsqrt.pop %v486
    %v503 = vrsqrt.pop %v487
    %v504 = vrsqrt.pop %v488
    %v505 = vrsqrt.pop %v489
    %v506 = vrsqrt.pop %v490
    %v507 = vrsqrt.pop %v491
    %v508 = vrsqrt.pop %v492
    %v509 = vrsqrt.pop %v493
    %v510 = vrsqrt.pop %v494
    %v511 = vrsqrt.pop %v495
    %v512 = vrsqrt.pop %v496
    %v513 = vrsqrt.pop %v497
    %v514 = vrsqrt.pop %v498
    %v515 = vrsqrt.pop %v499
    %v516 = vmul.f32 %v438, %v500
    %v517 = vmul.f32 %v441, %v501
    %v518 = vmul.f32 %v444, %v502
    %v519 = vmul.f32 %v447, %v503
    %v520 = vmul.f32 %v450, %v504
    %v521 = vmul.f32 %v453, %v505
    %v522 = vmul.f32 %v456, %v506
    %v523 = vmul.f32 %v459, %v507
    %v524 = vmul.f32 %v462, %v508
    %v525 = vmul.f32 %v465, %v509
    %v526 = vmul.f32 %v468, %v510
    %v527 = vmul.f32 %v471, %v511
    %v528 = vmul.f32 %v474, %v512
    %v529 = vmul.f32 %v477, %v513
    %v530 = vmul.f32 %v480, %v514
    %v531 = vmul.f32 %v483, %v515
    %s532 = sld [smem:[#allocation2]]
    %v533 = vstv %s532
    %v534 = vadd.f32 %v516, %v533
    %v535 = vadd.f32 %v517, %v533
    %v536 = vadd.f32 %v518, %v533
    %v537 = vadd.f32 %v519, %v533
    %v538 = vadd.f32 %v520, %v533
    %v539 = vadd.f32 %v521, %v533
    %v540 = vadd.f32 %v522, %v533
    %v541 = vadd.f32 %v523, %v533
    %v542 = vadd.f32 %v524, %v533
    %v543 = vadd.f32 %v525, %v533
    %v544 = vadd.f32 %v526, %v533
    %v545 = vadd.f32 %v527, %v533
    %v546 = vadd.f32 %v528, %v533
    %v547 = vadd.f32 %v529, %v533
    %v548 = vadd.f32 %v530, %v533
    %v549 = vadd.f32 %v531, %v533
    %v566 = vlaneseq
    %v567 = vand.u32 %v566, 127
    %v568 = vlaneseq
    %v569 = vshrl.u32 %v568, 7
    %v570 = vsub.s32 %v567, %v569
    %v571 = vrot.slane %v534, %v570
    %v572 = vadd.s32 %v567, 4294967288
    %v573 = vlaneseq
    %v574 = vshrl.u32 %v573, 7
    %v575 = vsub.s32 %v572, %v574
    %v576 = vrot.slane %v535, %v575
    %vm577 = vcmask 130112
    %v578 = vsel %vm577, %v576, %v571
    %v579 = vadd.s32 %v567, 4294967280
    %v580 = vlaneseq
    %v581 = vshrl.u32 %v580, 7
    %v582 = vsub.s32 %v579, %v581
    %v583 = vrot.slane %v536, %v582
    %vm584 = vcmask 195712
    %v585 = vsel %vm584, %v583, %v578
    %v586 = vadd.s32 %v567, 4294967272
    %v587 = vlaneseq
    %v588 = vshrl.u32 %v587, 7
    %v589 = vsub.s32 %v586, %v588
    %v590 = vrot.slane %v537, %v589
    %vm591 = vcmask 261312
    %v592 = vsel %vm591, %v590, %v585
    %v593 = vadd.s32 %v567, 4294967264
    %v594 = vlaneseq
    %v595 = vshrl.u32 %v594, 7
    %v596 = vsub.s32 %v593, %v595
    %v597 = vrot.slane %v538, %v596
    %vm598 = vcmask 326912
    %v599 = vsel %vm598, %v597, %v592
    %v600 = vadd.s32 %v567, 4294967256
    %v601 = vlaneseq
    %v602 = vshrl.u32 %v601, 7
    %v603 = vsub.s32 %v600, %v602
    %v604 = vrot.slane %v539, %v603
    %vm605 = vcmask 392512
    %v606 = vsel %vm605, %v604, %v599
    %v607 = vadd.s32 %v567, 4294967248
    %v608 = vlaneseq
    %v609 = vshrl.u32 %v608, 7
    %v610 = vsub.s32 %v607, %v609
    %v611 = vrot.slane %v540, %v610
    %vm612 = vcmask 458112
    %v613 = vsel %vm612, %v611, %v606
    %v614 = vadd.s32 %v567, 4294967240
    %v615 = vlaneseq
    %v616 = vshrl.u32 %v615, 7
    %v617 = vsub.s32 %v614, %v616
    %v618 = vrot.slane %v541, %v617
    %vm619 = vcmask 523712
    %v620 = vsel %vm619, %v618, %v613
    %v621 = vadd.s32 %v567, 4294967232
    %v622 = vlaneseq
    %v623 = vshrl.u32 %v622, 7
    %v624 = vsub.s32 %v621, %v623
    %v625 = vrot.slane %v542, %v624
    %vm626 = vcmask 589312
    %v627 = vsel %vm626, %v625, %v620
    %v628 = vadd.s32 %v567, 4294967224
    %v629 = vlaneseq
    %v630 = vshrl.u32 %v629, 7
    %v631 = vsub.s32 %v628, %v630
    %v632 = vrot.slane %v543, %v631
    %vm633 = vcmask 654912
    %v634 = vsel %vm633, %v632, %v627
    %v635 = vadd.s32 %v567, 4294967216
    %v636 = vlaneseq
    %v637 = vshrl.u32 %v636, 7
    %v638 = vsub.s32 %v635, %v637
    %v639 = vrot.slane %v544, %v638
    %vm640 = vcmask 720512
    %v641 = vsel %vm640, %v639, %v634
    %v642 = vadd.s32 %v567, 4294967208
    %v643 = vlaneseq
    %v644 = vshrl.u32 %v643, 7
    %v645 = vsub.s32 %v642, %v644
    %v646 = vrot.slane %v545, %v645
    %vm647 = vcmask 786112
    %v648 = vsel %vm647, %v646, %v641
    %v649 = vadd.s32 %v567, 4294967200
    %v650 = vlaneseq
    %v651 = vshrl.u32 %v650, 7
    %v652 = vsub.s32 %v649, %v651
    %v653 = vrot.slane %v546, %v652
    %vm654 = vcmask 851712
    %v655 = vsel %vm654, %v653, %v648
    %v656 = vadd.s32 %v567, 4294967192
    %v657 = vlaneseq
    %v658 = vshrl.u32 %v657, 7
    %v659 = vsub.s32 %v656, %v658
    %v660 = vrot.slane %v547, %v659
    %vm661 = vcmask 917312
    %v662 = vsel %vm661, %v660, %v655
    %v663 = vadd.s32 %v567, 4294967184
    %v664 = vlaneseq
    %v665 = vshrl.u32 %v664, 7
    %v666 = vsub.s32 %v663, %v665
    %v667 = vrot.slane %v548, %v666
    %vm668 = vcmask 982912
    %v669 = vsel %vm668, %v667, %v662
    %v670 = vadd.s32 %v567, 4294967176
    %v671 = vlaneseq
    %v672 = vshrl.u32 %v671, 7
    %v673 = vsub.s32 %v670, %v672
    %v674 = vrot.slane %v549, %v673
    %vm675 = vcmask 1048512
    %v676 = vsel %vm675, %v674, %v669
    %678 = vst [vmem:[#allocation3] sm:$0x1] %v676
    // Predicated region
    $region18: #{tpu_custom_call.1} parent=1 // pred_check
      _
    $region19: #{tpu_custom_call.1} parent=1 // pred_check_branch
      %680 = sbr.rel (0) target = $region21
    $region20: #{tpu_custom_call.1} parent=1 // pred_region
      %s682 = ssub.s32 16, 16
      %683 = vsyncadd [#allocation4], %s682
      %s685 = sshll.u32 [#allocation3], 4
      %s686 = int_to_ptr.vmem [resolvable:$true] %s685
      %688 = dma.vmem_to_hbm [thread:$0]  %s686, 16, %s4, [#allocation4]
    $region21: #{tpu_custom_call.1} parent=1 // pred_fallthru
      _
    // Predicated region
    $region22: #{tpu_custom_call.1} parent=1 // pred_check
      _
    $region23: #{tpu_custom_call.1} parent=1 // pred_check_branch
      %690 = sbr.rel (0) target = $region25
    $region24: #{tpu_custom_call.1} parent=1 // pred_region
      %691 = dma.done [#allocation4], 16
    $region25: #{tpu_custom_call.1} parent=1 // pred_fallthru
      _
    %692 = vsyncpa [#allocation4], 1

// kernel: tpu_custom_call.1
$region0: #{tpu_custom_call.1}
  #allocation0 [shape = 'u32[]', space=smem, size = 0x4, offset = 0x4, fixed_abs, tag = 'smem constant byte address 0x4 - core index']
  #allocation1 [shape = 'u32[144,128]{1,0:T(1,128)}', space=vmem, size = 0x12000, scoped, tag = 'internal scratch']
  #allocation2 [shape = 'f32[1]{0:T(128)S(6)}', space=smem, size = 0x200, scoped, tag = 'scoped memory for tpu_custom_call.1']
  %s0 = inlined_call_operand.vmem [shape: f32[128,32], index: 0, kind: input, shape index: {}]
  %s1 = inlined_call_operand.vmem [shape: f32[32,32], index: 1, kind: input, shape index: {}]
  %s2 = inlined_call_operand.vmem [shape: f32[8,32], index: 2, kind: input, shape index: {}]
  %s3 = inlined_call_operand.<no memory space> [shape: f32[1], index: 3, kind: input, shape index: {}]
  %s4 = inlined_call_operand.hbm [shape: f32[1,128], index: 4, kind: output, shape index: {}]
  %s5 = sld [smem:[#allocation0]]
  $region26: #{tpu_custom_call.1} parent=0
    _
  %s7 = ssub.s32 1, %s5
  %s8 = scalar_select 0, %s7, %s5
  %9 = sst [smem:[#allocation2]] %s3
  $region1: #{tpu_custom_call.1} parent=0
    #allocation3 [shape = 'u8[512]{0}', space=vmem, size = 0x400, scoped, tag = 'output window, operand 0, single buffered']
    #allocation4 [shape = 's32[1]{0}', space=sflag, size = 0x4, scoped, tag = 'scoped memory for tpu_custom_call.1']
    %10 = vsyncpa [#allocation4], 0
    // Predicated region
    $region2: #{tpu_custom_call.1} parent=1 // pred_check
      _
    $region3: #{tpu_custom_call.1} parent=1 // pred_check_branch
      %12 = sbr.rel (0) target = $region5
    $region4: #{tpu_custom_call.1} parent=1 // pred_region
      _
    $region5: #{tpu_custom_call.1} parent=1 // pred_fallthru
      _
    // Predicated region
    $region6: #{tpu_custom_call.1} parent=1 // pred_check
      _
    $region7: #{tpu_custom_call.1} parent=1 // pred_check_branch
      %14 = sbr.rel (0) target = $region9
    $region8: #{tpu_custom_call.1} parent=1 // pred_region
      _
    $region9: #{tpu_custom_call.1} parent=1 // pred_fallthru
      _
    // Predicated region
    $region10: #{tpu_custom_call.1} parent=1 // pred_check
      _
    $region11: #{tpu_custom_call.1} parent=1 // pred_check_branch
      %16 = sbr.rel (0) target = $region13
    $region12: #{tpu_custom_call.1} parent=1 // pred_region
      _
    $region13: #{tpu_custom_call.1} parent=1 // pred_fallthru
      _
    // Predicated region
    $region14: #{tpu_custom_call.1} parent=1 // pred_check
      _
    $region15: #{tpu_custom_call.1} parent=1 // pred_check_branch
      %18 = sbr.rel (0) target = $region17
    $region16: #{tpu_custom_call.1} parent=1 // pred_region
      _
    $region17: #{tpu_custom_call.1} parent=1 // pred_fallthru
      _
    %v19 = vld [vmem:[%s0] sm:$0xff]
    %v20 = vld [vmem:[%s0 + $0x8] sm:$0xff]
    %v21 = vld [vmem:[%s0 + $0x10] sm:$0xff]
    %v22 = vld [vmem:[%s0 + $0x18] sm:$0xff]
    %v23 = vld [vmem:[%s0 + $0x20] sm:$0xff]
    %v24 = vld [vmem:[%s0 + $0x28] sm:$0xff]
    %v25 = vld [vmem:[%s0 + $0x30] sm:$0xff]
    %v26 = vld [vmem:[%s0 + $0x38] sm:$0xff]
    %v27 = vld [vmem:[%s0 + $0x40] sm:$0xff]
    %v28 = vld [vmem:[%s0 + $0x48] sm:$0xff]
    %v29 = vld [vmem:[%s0 + $0x50] sm:$0xff]
    %v30 = vld [vmem:[%s0 + $0x58] sm:$0xff]
    %v31 = vld [vmem:[%s0 + $0x60] sm:$0xff]
    %v32 = vld [vmem:[%s0 + $0x68] sm:$0xff]
    %v33 = vld [vmem:[%s0 + $0x70] sm:$0xff]
    %v34 = vld [vmem:[%s0 + $0x78] sm:$0xff]
    %v35 = vld [vmem:[%s1] sm:$0xff]
    %v36 = vld [vmem:[%s1 + $0x8] sm:$0xff]
    %v37 = vld [vmem:[%s1 + $0x10] sm:$0xff]
    %v38 = vld [vmem:[%s1 + $0x18] sm:$0xff]
    %v39 = vld [vmem:[%s2] sm:$0x1]
    %v40 = vld [vmem:[%s2 + $0x1] sm:$0x1]
    %v41 = vlaneseq
    %v42 = vshrl.u32 %v41, 7
    %v43 = vsub.s32 0, %v42
    %v44 = vrot.slane %v39, %v43
    %vm45 = vcmask 261120
    %v47 = vsel %vm45, %v19, 0
    %v50 = vsel %vm45, %v20, 0
    %v53 = vsel %vm45, %v21, 0
    %v56 = vsel %vm45, %v22, 0
    %v59 = vsel %vm45, %v23, 0
    %v62 = vsel %vm45, %v24, 0
    %v65 = vsel %vm45, %v25, 0
    %v68 = vsel %vm45, %v26, 0
    %v71 = vsel %vm45, %v27, 0
    %v74 = vsel %vm45, %v28, 0
    %v77 = vsel %vm45, %v29, 0
    %v80 = vsel %vm45, %v30, 0
    %v83 = vsel %vm45, %v31, 0
    %v86 = vsel %vm45, %v32, 0
    %v89 = vsel %vm45, %v33, 0
    %v92 = vsel %vm45, %v34, 0
    %94 = vmatprep.subr.mxu0 0.0
    %95 = vmatpush1.msra.mxu0 0.0
    %96 = vmatprep.subr.mxu0 0.0
    %97 = vmatpush1.msra.mxu0 0.0
    %98 = vmatprep.subr.mxu0 0.0
    %99 = vmatpush1.msra.mxu0 0.0
    %100 = vmatprep.subr.mxu0 0.0
    %101 = vmatpush1.msra.mxu0 0.0
    %102 = vmatprep.subr.mxu0 0.0
    %103 = vmatpush1.msra.mxu0 0.0
    %104 = vmatprep.subr.mxu0 0.0
    %105 = vmatpush1.msra.mxu0 0.0
    %106 = vmatprep.subr.mxu0 0.0
    %107 = vmatpush1.msra.mxu0 0.0
    %108 = vmatprep.subr.mxu0 0.0
    %109 = vmatpush1.msra.mxu0 0.0
    %110 = vmatprep.subr.mxu0 0.0
    %111 = vmatpush1.msra.mxu0 0.0
    %112 = vmatprep.subr.mxu0 0.0
    %113 = vmatpush1.msra.mxu0 0.0
    %114 = vmatprep.subr.mxu0 0.0
    %115 = vmatpush1.msra.mxu0 0.0
    %116 = vmatprep.subr.mxu0 0.0
    %117 = vmatpush1.msra.mxu0 0.0
    %118 = vmatprep.subr.mxu0 0.0
    %119 = vmatpush1.msra.mxu0 %v38
    %120 = vmatprep.subr.mxu0 0.0
    %121 = vmatpush1.msra.mxu0 %v37
    %122 = vmatprep.subr.mxu0 0.0
    %123 = vmatpush1.msra.mxu0 %v36
    %124 = vmatprep.subr.mxu0 0.0
    %125 = vmatpush1.msra.mxu0 %v35
    %126 = vmatprep.subr.mxu0 0.0
    %127 = vmatpush2.msra.mxu0 0.0
    %128 = vmatprep.subr.mxu0 0.0
    %129 = vmatpush2.msra.mxu0 0.0
    %130 = vmatprep.subr.mxu0 0.0
    %131 = vmatpush2.msra.mxu0 0.0
    %132 = vmatprep.subr.mxu0 0.0
    %133 = vmatpush2.msra.mxu0 0.0
    %134 = vmatprep.subr.mxu0 0.0
    %135 = vmatpush2.msra.mxu0 0.0
    %136 = vmatprep.subr.mxu0 0.0
    %137 = vmatpush2.msra.mxu0 0.0
    %138 = vmatprep.subr.mxu0 0.0
    %139 = vmatpush2.msra.mxu0 0.0
    %140 = vmatprep.subr.mxu0 0.0
    %141 = vmatpush2.msra.mxu0 0.0
    %142 = vmatprep.subr.mxu0 0.0
    %143 = vmatpush2.msra.mxu0 0.0
    %144 = vmatprep.subr.mxu0 0.0
    %145 = vmatpush2.msra.mxu0 0.0
    %146 = vmatprep.subr.mxu0 0.0
    %147 = vmatpush2.msra.mxu0 0.0
    %148 = vmatprep.subr.mxu0 0.0
    %149 = vmatpush2.msra.mxu0 0.0
    %150 = vmatprep.subr.mxu0 0.0
    %151 = vmatpush2.msra.mxu0 0.0
    %152 = vmatprep.subr.mxu0 0.0
    %153 = vmatpush2.msra.mxu0 0.0
    %154 = vmatprep.subr.mxu0 0.0
    %155 = vmatpush2.msra.mxu0 0.0
    %156 = vmatprep.subr.mxu0 0.0
    %157 = vmatpush2.msra.mxu0 0.0
    %158 = vmatprep.mubr.f32.mxu0 0.0
    %159 = vmatmul.mubr.f32.gmra.mxu0 %v47
    %v160 = vpop.f32.mrf.mxu0
    %v161 = vadd.f32 %v44, %v160
    %v162 = vpop.f32.mrf.mxu0
    %163 = vmatprep.mubr.f32.mxu0 0.0
    %164 = vmatmul.mubr.f32.gmra.mxu0 %v50
    %v165 = vpop.f32.mrf.mxu0
    %v166 = vadd.f32 %v44, %v165
    %v167 = vpop.f32.mrf.mxu0
    %168 = vmatprep.mubr.f32.mxu0 0.0
    %169 = vmatmul.mubr.f32.gmra.mxu0 %v53
    %v170 = vpop.f32.mrf.mxu0
    %v171 = vadd.f32 %v44, %v170
    %v172 = vpop.f32.mrf.mxu0
    %173 = vmatprep.mubr.f32.mxu0 0.0
    %174 = vmatmul.mubr.f32.gmra.mxu0 %v56
    %v175 = vpop.f32.mrf.mxu0
    %v176 = vadd.f32 %v44, %v175
    %v177 = vpop.f32.mrf.mxu0
    %178 = vmatprep.mubr.f32.mxu0 0.0
    %179 = vmatmul.mubr.f32.gmra.mxu0 %v59
    %v180 = vpop.f32.mrf.mxu0
    %v181 = vadd.f32 %v44, %v180
    %v182 = vpop.f32.mrf.mxu0
    %183 = vmatprep.mubr.f32.mxu0 0.0
    %184 = vmatmul.mubr.f32.gmra.mxu0 %v62
    %v185 = vpop.f32.mrf.mxu0
    %v186 = vadd.f32 %v44, %v185
    %v187 = vpop.f32.mrf.mxu0
    %188 = vmatprep.mubr.f32.mxu0 0.0
    %189 = vmatmul.mubr.f32.gmra.mxu0 %v65
    %v190 = vpop.f32.mrf.mxu0
    %v191 = vadd.f32 %v44, %v190
    %v192 = vpop.f32.mrf.mxu0
    %193 = vmatprep.mubr.f32.mxu0 0.0
    %194 = vmatmul.mubr.f32.gmra.mxu0 %v68
    %v195 = vpop.f32.mrf.mxu0
    %v196 = vadd.f32 %v44, %v195
    %v197 = vpop.f32.mrf.mxu0
    %198 = vmatprep.mubr.f32.mxu0 0.0
    %199 = vmatmul.mubr.f32.gmra.mxu0 %v71
    %v200 = vpop.f32.mrf.mxu0
    %v201 = vadd.f32 %v44, %v200
    %v202 = vpop.f32.mrf.mxu0
    %203 = vmatprep.mubr.f32.mxu0 0.0
    %204 = vmatmul.mubr.f32.gmra.mxu0 %v74
    %v205 = vpop.f32.mrf.mxu0
    %v206 = vadd.f32 %v44, %v205
    %v207 = vpop.f32.mrf.mxu0
    %208 = vmatprep.mubr.f32.mxu0 0.0
    %209 = vmatmul.mubr.f32.gmra.mxu0 %v77
    %v210 = vpop.f32.mrf.mxu0
    %v211 = vadd.f32 %v44, %v210
    %v212 = vpop.f32.mrf.mxu0
    %213 = vmatprep.mubr.f32.mxu0 0.0
    %214 = vmatmul.mubr.f32.gmra.mxu0 %v80
    %v215 = vpop.f32.mrf.mxu0
    %v216 = vadd.f32 %v44, %v215
    %v217 = vpop.f32.mrf.mxu0
    %218 = vmatprep.mubr.f32.mxu0 0.0
    %219 = vmatmul.mubr.f32.gmra.mxu0 %v83
    %v220 = vpop.f32.mrf.mxu0
    %v221 = vadd.f32 %v44, %v220
    %v222 = vpop.f32.mrf.mxu0
    %223 = vmatprep.mubr.f32.mxu0 0.0
    %224 = vmatmul.mubr.f32.gmra.mxu0 %v86
    %v225 = vpop.f32.mrf.mxu0
    %v226 = vadd.f32 %v44, %v225
    %v227 = vpop.f32.mrf.mxu0
    %228 = vmatprep.mubr.f32.mxu0 0.0
    %229 = vmatmul.mubr.f32.gmra.mxu0 %v89
    %v230 = vpop.f32.mrf.mxu0
    %v231 = vadd.f32 %v44, %v230
    %v232 = vpop.f32.mrf.mxu0
    %233 = vmatprep.mubr.f32.mxu0 0.0
    %234 = vmatmul.mubr.f32.gmra.mxu0 %v92
    %v235 = vpop.f32.mrf.mxu0
    %v236 = vadd.f32 %v44, %v235
    %v237 = vpop.f32.mrf.mxu0
    %238 = vdwg.mxu0
    %v239 = vmax.f32 %v161, 0.0
    %v240 = vmax.f32 %v166, 0.0
    %v241 = vmax.f32 %v171, 0.0
    %v242 = vmax.f32 %v176, 0.0
    %v243 = vmax.f32 %v181, 0.0
    %v244 = vmax.f32 %v186, 0.0
    %v245 = vmax.f32 %v191, 0.0
    %v246 = vmax.f32 %v196, 0.0
    %v247 = vmax.f32 %v201, 0.0
    %v248 = vmax.f32 %v206, 0.0
    %v249 = vmax.f32 %v211, 0.0
    %v250 = vmax.f32 %v216, 0.0
    %v251 = vmax.f32 %v221, 0.0
    %v252 = vmax.f32 %v226, 0.0
    %v253 = vmax.f32 %v231, 0.0
    %v254 = vmax.f32 %v236, 0.0
    %v255 = vsel %vm45, %v239, 0.0
    %256 = vadd.xlane.f32.xlu0 %v255
    %v257 = vpop.xlane.xlu0 %256
    %v258 = vsel %vm45, %v240, 0.0
    %259 = vadd.xlane.f32.xlu0 %v258
    %v260 = vpop.xlane.xlu0 %259
    %v261 = vsel %vm45, %v241, 0.0
    %262 = vadd.xlane.f32.xlu0 %v261
    %v263 = vpop.xlane.xlu0 %262
    %v264 = vsel %vm45, %v242, 0.0
    %265 = vadd.xlane.f32.xlu0 %v264
    %v266 = vpop.xlane.xlu0 %265
    %v267 = vsel %vm45, %v243, 0.0
    %268 = vadd.xlane.f32.xlu0 %v267
    %v269 = vpop.xlane.xlu0 %268
    %v270 = vsel %vm45, %v244, 0.0
    %271 = vadd.xlane.f32.xlu0 %v270
    %v272 = vpop.xlane.xlu0 %271
    %v273 = vsel %vm45, %v245, 0.0
    %274 = vadd.xlane.f32.xlu0 %v273
    %v275 = vpop.xlane.xlu0 %274
    %v276 = vsel %vm45, %v246, 0.0
    %277 = vadd.xlane.f32.xlu0 %v276
    %v278 = vpop.xlane.xlu0 %277
    %v279 = vsel %vm45, %v247, 0.0
    %280 = vadd.xlane.f32.xlu0 %v279
    %v281 = vpop.xlane.xlu0 %280
    %v282 = vsel %vm45, %v248, 0.0
    %283 = vadd.xlane.f32.xlu0 %v282
    %v284 = vpop.xlane.xlu0 %283
    %v285 = vsel %vm45, %v249, 0.0
    %286 = vadd.xlane.f32.xlu0 %v285
    %v287 = vpop.xlane.xlu0 %286
    %v288 = vsel %vm45, %v250, 0.0
    %289 = vadd.xlane.f32.xlu0 %v288
    %v290 = vpop.xlane.xlu0 %289
    %v291 = vsel %vm45, %v251, 0.0
    %292 = vadd.xlane.f32.xlu0 %v291
    %v293 = vpop.xlane.xlu0 %292
    %v294 = vsel %vm45, %v252, 0.0
    %295 = vadd.xlane.f32.xlu0 %v294
    %v296 = vpop.xlane.xlu0 %295
    %v297 = vsel %vm45, %v253, 0.0
    %298 = vadd.xlane.f32.xlu0 %v297
    %v299 = vpop.xlane.xlu0 %298
    %v300 = vsel %vm45, %v254, 0.0
    %301 = vadd.xlane.f32.xlu0 %v300
    %v302 = vpop.xlane.xlu0 %301
    %v303 = vrcp.pop 32.0
    %v304 = vmul.f32 %v257, %v303
    %v305 = vmul.f32 %v260, %v303
    %v306 = vmul.f32 %v263, %v303
    %v307 = vmul.f32 %v266, %v303
    %v308 = vmul.f32 %v269, %v303
    %v309 = vmul.f32 %v272, %v303
    %v310 = vmul.f32 %v275, %v303
    %v311 = vmul.f32 %v278, %v303
    %v312 = vmul.f32 %v281, %v303
    %v313 = vmul.f32 %v284, %v303
    %v314 = vmul.f32 %v287, %v303
    %v315 = vmul.f32 %v290, %v303
    %v316 = vmul.f32 %v293, %v303
    %v317 = vmul.f32 %v296, %v303
    %v318 = vmul.f32 %v299, %v303
    %v319 = vmul.f32 %v302, %v303
    %v320 = vsub.f32 %v239, %v304
    %v321 = vsub.f32 %v240, %v305
    %v322 = vsub.f32 %v241, %v306
    %v323 = vsub.f32 %v242, %v307
    %v324 = vsub.f32 %v243, %v308
    %v325 = vsub.f32 %v244, %v309
    %v326 = vsub.f32 %v245, %v310
    %v327 = vsub.f32 %v246, %v311
    %v328 = vsub.f32 %v247, %v312
    %v329 = vsub.f32 %v248, %v313
    %v330 = vsub.f32 %v249, %v314
    %v331 = vsub.f32 %v250, %v315
    %v332 = vsub.f32 %v251, %v316
    %v333 = vsub.f32 %v252, %v317
    %v334 = vsub.f32 %v253, %v318
    %v335 = vsub.f32 %v254, %v319
    %v336 = vmul.f32 %v320, %v320
    %v337 = vmul.f32 %v321, %v321
    %v338 = vmul.f32 %v322, %v322
    %v339 = vmul.f32 %v323, %v323
    %v340 = vmul.f32 %v324, %v324
    %v341 = vmul.f32 %v325, %v325
    %v342 = vmul.f32 %v326, %v326
    %v343 = vmul.f32 %v327, %v327
    %v344 = vmul.f32 %v328, %v328
    %v345 = vmul.f32 %v329, %v329
    %v346 = vmul.f32 %v330, %v330
    %v347 = vmul.f32 %v331, %v331
    %v348 = vmul.f32 %v332, %v332
    %v349 = vmul.f32 %v333, %v333
    %v350 = vmul.f32 %v334, %v334
    %v351 = vmul.f32 %v335, %v335
    %v352 = vsel %vm45, %v336, 0.0
    %353 = vadd.xlane.f32.xlu0 %v352
    %v354 = vpop.xlane.xlu0 %353
    %v355 = vsel %vm45, %v337, 0.0
    %356 = vadd.xlane.f32.xlu0 %v355
    %v357 = vpop.xlane.xlu0 %356
    %v358 = vsel %vm45, %v338, 0.0
    %359 = vadd.xlane.f32.xlu0 %v358
    %v360 = vpop.xlane.xlu0 %359
    %v361 = vsel %vm45, %v339, 0.0
    %362 = vadd.xlane.f32.xlu0 %v361
    %v363 = vpop.xlane.xlu0 %362
    %v364 = vsel %vm45, %v340, 0.0
    %365 = vadd.xlane.f32.xlu0 %v364
    %v366 = vpop.xlane.xlu0 %365
    %v367 = vsel %vm45, %v341, 0.0
    %368 = vadd.xlane.f32.xlu0 %v367
    %v369 = vpop.xlane.xlu0 %368
    %v370 = vsel %vm45, %v342, 0.0
    %371 = vadd.xlane.f32.xlu0 %v370
    %v372 = vpop.xlane.xlu0 %371
    %v373 = vsel %vm45, %v343, 0.0
    %374 = vadd.xlane.f32.xlu0 %v373
    %v375 = vpop.xlane.xlu0 %374
    %v376 = vsel %vm45, %v344, 0.0
    %377 = vadd.xlane.f32.xlu0 %v376
    %v378 = vpop.xlane.xlu0 %377
    %v379 = vsel %vm45, %v345, 0.0
    %380 = vadd.xlane.f32.xlu0 %v379
    %v381 = vpop.xlane.xlu0 %380
    %v382 = vsel %vm45, %v346, 0.0
    %383 = vadd.xlane.f32.xlu0 %v382
    %v384 = vpop.xlane.xlu0 %383
    %v385 = vsel %vm45, %v347, 0.0
    %386 = vadd.xlane.f32.xlu0 %v385
    %v387 = vpop.xlane.xlu0 %386
    %v388 = vsel %vm45, %v348, 0.0
    %389 = vadd.xlane.f32.xlu0 %v388
    %v390 = vpop.xlane.xlu0 %389
    %v391 = vsel %vm45, %v349, 0.0
    %392 = vadd.xlane.f32.xlu0 %v391
    %v393 = vpop.xlane.xlu0 %392
    %v394 = vsel %vm45, %v350, 0.0
    %395 = vadd.xlane.f32.xlu0 %v394
    %v396 = vpop.xlane.xlu0 %395
    %v397 = vsel %vm45, %v351, 0.0
    %398 = vadd.xlane.f32.xlu0 %v397
    %v399 = vpop.xlane.xlu0 %398
    %v400 = vmul.f32 %v354, %v303
    %v401 = vmul.f32 %v357, %v303
    %v402 = vmul.f32 %v360, %v303
    %v403 = vmul.f32 %v363, %v303
    %v404 = vmul.f32 %v366, %v303
    %v405 = vmul.f32 %v369, %v303
    %v406 = vmul.f32 %v372, %v303
    %v407 = vmul.f32 %v375, %v303
    %v408 = vmul.f32 %v378, %v303
    %v409 = vmul.f32 %v381, %v303
    %v410 = vmul.f32 %v384, %v303
    %v411 = vmul.f32 %v387, %v303
    %v412 = vmul.f32 %v390, %v303
    %v413 = vmul.f32 %v393, %v303
    %v414 = vmul.f32 %v396, %v303
    %v415 = vmul.f32 %v399, %v303
    %v416 = vlaneseq
    %v417 = vshrl.u32 %v416, 7
    %v418 = vsub.s32 0, %v417
    %v419 = vrot.slane %v40, %v418
    %v420 = vmul.f32 %v320, %v419
    %v421 = vmul.f32 %v321, %v419
    %v422 = vmul.f32 %v322, %v419
    %v423 = vmul.f32 %v323, %v419
    %v424 = vmul.f32 %v324, %v419
    %v425 = vmul.f32 %v325, %v419
    %v426 = vmul.f32 %v326, %v419
    %v427 = vmul.f32 %v327, %v419
    %v428 = vmul.f32 %v328, %v419
    %v429 = vmul.f32 %v329, %v419
    %v430 = vmul.f32 %v330, %v419
    %v431 = vmul.f32 %v331, %v419
    %v432 = vmul.f32 %v332, %v419
    %v433 = vmul.f32 %v333, %v419
    %v434 = vmul.f32 %v334, %v419
    %v435 = vmul.f32 %v335, %v419
    %v436 = vsel %vm45, %v420, 0.0
    %437 = vadd.xlane.f32.xlu0 %v436
    %v438 = vpop.xlane.xlu0 %437
    %v439 = vsel %vm45, %v421, 0.0
    %440 = vadd.xlane.f32.xlu0 %v439
    %v441 = vpop.xlane.xlu0 %440
    %v442 = vsel %vm45, %v422, 0.0
    %443 = vadd.xlane.f32.xlu0 %v442
    %v444 = vpop.xlane.xlu0 %443
    %v445 = vsel %vm45, %v423, 0.0
    %446 = vadd.xlane.f32.xlu0 %v445
    %v447 = vpop.xlane.xlu0 %446
    %v448 = vsel %vm45, %v424, 0.0
    %449 = vadd.xlane.f32.xlu0 %v448
    %v450 = vpop.xlane.xlu0 %449
    %v451 = vsel %vm45, %v425, 0.0
    %452 = vadd.xlane.f32.xlu0 %v451
    %v453 = vpop.xlane.xlu0 %452
    %v454 = vsel %vm45, %v426, 0.0
    %455 = vadd.xlane.f32.xlu0 %v454
    %v456 = vpop.xlane.xlu0 %455
    %v457 = vsel %vm45, %v427, 0.0
    %458 = vadd.xlane.f32.xlu0 %v457
    %v459 = vpop.xlane.xlu0 %458
    %v460 = vsel %vm45, %v428, 0.0
    %461 = vadd.xlane.f32.xlu0 %v460
    %v462 = vpop.xlane.xlu0 %461
    %v463 = vsel %vm45, %v429, 0.0
    %464 = vadd.xlane.f32.xlu0 %v463
    %v465 = vpop.xlane.xlu0 %464
    %v466 = vsel %vm45, %v430, 0.0
    %467 = vadd.xlane.f32.xlu0 %v466
    %v468 = vpop.xlane.xlu0 %467
    %v469 = vsel %vm45, %v431, 0.0
    %470 = vadd.xlane.f32.xlu0 %v469
    %v471 = vpop.xlane.xlu0 %470
    %v472 = vsel %vm45, %v432, 0.0
    %473 = vadd.xlane.f32.xlu0 %v472
    %v474 = vpop.xlane.xlu0 %473
    %v475 = vsel %vm45, %v433, 0.0
    %476 = vadd.xlane.f32.xlu0 %v475
    %v477 = vpop.xlane.xlu0 %476
    %v478 = vsel %vm45, %v434, 0.0
    %479 = vadd.xlane.f32.xlu0 %v478
    %v480 = vpop.xlane.xlu0 %479
    %v481 = vsel %vm45, %v435, 0.0
    %482 = vadd.xlane.f32.xlu0 %v481
    %v483 = vpop.xlane.xlu0 %482
    %v484 = vadd.f32 %v400, 1e-12
    %v485 = vadd.f32 %v401, 1e-12
    %v486 = vadd.f32 %v402, 1e-12
    %v487 = vadd.f32 %v403, 1e-12
    %v488 = vadd.f32 %v404, 1e-12
    %v489 = vadd.f32 %v405, 1e-12
    %v490 = vadd.f32 %v406, 1e-12
    %v491 = vadd.f32 %v407, 1e-12
    %v492 = vadd.f32 %v408, 1e-12
    %v493 = vadd.f32 %v409, 1e-12
    %v494 = vadd.f32 %v410, 1e-12
    %v495 = vadd.f32 %v411, 1e-12
    %v496 = vadd.f32 %v412, 1e-12
    %v497 = vadd.f32 %v413, 1e-12
    %v498 = vadd.f32 %v414, 1e-12
    %v499 = vadd.f32 %v415, 1e-12
    %v500 = vrsqrt.pop %v484
    %v501 = vrsqrt.pop %v485
    %v502 = vrsqrt.pop %v486
    %v503 = vrsqrt.pop %v487
    %v504 = vrsqrt.pop %v488
    %v505 = vrsqrt.pop %v489
    %v506 = vrsqrt.pop %v490
    %v507 = vrsqrt.pop %v491
    %v508 = vrsqrt.pop %v492
    %v509 = vrsqrt.pop %v493
    %v510 = vrsqrt.pop %v494
    %v511 = vrsqrt.pop %v495
    %v512 = vrsqrt.pop %v496
    %v513 = vrsqrt.pop %v497
    %v514 = vrsqrt.pop %v498
    %v515 = vrsqrt.pop %v499
    %v516 = vmul.f32 %v438, %v500
    %v517 = vmul.f32 %v441, %v501
    %v518 = vmul.f32 %v444, %v502
    %v519 = vmul.f32 %v447, %v503
    %v520 = vmul.f32 %v450, %v504
    %v521 = vmul.f32 %v453, %v505
    %v522 = vmul.f32 %v456, %v506
    %v523 = vmul.f32 %v459, %v507
    %v524 = vmul.f32 %v462, %v508
    %v525 = vmul.f32 %v465, %v509
    %v526 = vmul.f32 %v468, %v510
    %v527 = vmul.f32 %v471, %v511
    %v528 = vmul.f32 %v474, %v512
    %v529 = vmul.f32 %v477, %v513
    %v530 = vmul.f32 %v480, %v514
    %v531 = vmul.f32 %v483, %v515
    %s532 = sld [smem:[#allocation2]]
    %v533 = vstv %s532
    %v534 = vadd.f32 %v516, %v533
    %v535 = vadd.f32 %v517, %v533
    %v536 = vadd.f32 %v518, %v533
    %v537 = vadd.f32 %v519, %v533
    %v538 = vadd.f32 %v520, %v533
    %v539 = vadd.f32 %v521, %v533
    %v540 = vadd.f32 %v522, %v533
    %v541 = vadd.f32 %v523, %v533
    %v542 = vadd.f32 %v524, %v533
    %v543 = vadd.f32 %v525, %v533
    %v544 = vadd.f32 %v526, %v533
    %v545 = vadd.f32 %v527, %v533
    %v546 = vadd.f32 %v528, %v533
    %v547 = vadd.f32 %v529, %v533
    %v548 = vadd.f32 %v530, %v533
    %v549 = vadd.f32 %v531, %v533
    %v566 = vlaneseq
    %v567 = vand.u32 %v566, 127
    %v568 = vlaneseq
    %v569 = vshrl.u32 %v568, 7
    %v570 = vsub.s32 %v567, %v569
    %v571 = vrot.slane %v534, %v570
    %v572 = vadd.s32 %v567, 4294967288
    %v573 = vlaneseq
    %v574 = vshrl.u32 %v573, 7
    %v575 = vsub.s32 %v572, %v574
    %v576 = vrot.slane %v535, %v575
    %vm577 = vcmask 130112
    %v578 = vsel %vm577, %v576, %v571
    %v579 = vadd.s32 %v567, 4294967280
    %v580 = vlaneseq
    %v581 = vshrl.u32 %v580, 7
    %v582 = vsub.s32 %v579, %v581
    %v583 = vrot.slane %v536, %v582
    %vm584 = vcmask 195712
    %v585 = vsel %vm584, %v583, %v578
    %v586 = vadd.s32 %v567, 4294967272
    %v587 = vlaneseq
    %v588 = vshrl.u32 %v587, 7
    %v589 = vsub.s32 %v586, %v588
    %v590 = vrot.slane %v537, %v589
    %vm591 = vcmask 261312
    %v592 = vsel %vm591, %v590, %v585
    %v593 = vadd.s32 %v567, 4294967264
    %v594 = vlaneseq
    %v595 = vshrl.u32 %v594, 7
    %v596 = vsub.s32 %v593, %v595
    %v597 = vrot.slane %v538, %v596
    %vm598 = vcmask 326912
    %v599 = vsel %vm598, %v597, %v592
    %v600 = vadd.s32 %v567, 4294967256
    %v601 = vlaneseq
    %v602 = vshrl.u32 %v601, 7
    %v603 = vsub.s32 %v600, %v602
    %v604 = vrot.slane %v539, %v603
    %vm605 = vcmask 392512
    %v606 = vsel %vm605, %v604, %v599
    %v607 = vadd.s32 %v567, 4294967248
    %v608 = vlaneseq
    %v609 = vshrl.u32 %v608, 7
    %v610 = vsub.s32 %v607, %v609
    %v611 = vrot.slane %v540, %v610
    %vm612 = vcmask 458112
    %v613 = vsel %vm612, %v611, %v606
    %v614 = vadd.s32 %v567, 4294967240
    %v615 = vlaneseq
    %v616 = vshrl.u32 %v615, 7
    %v617 = vsub.s32 %v614, %v616
    %v618 = vrot.slane %v541, %v617
    %vm619 = vcmask 523712
    %v620 = vsel %vm619, %v618, %v613
    %v621 = vadd.s32 %v567, 4294967232
    %v622 = vlaneseq
    %v623 = vshrl.u32 %v622, 7
    %v624 = vsub.s32 %v621, %v623
    %v625 = vrot.slane %v542, %v624
    %vm626 = vcmask 589312
    %v627 = vsel %vm626, %v625, %v620
    %v628 = vadd.s32 %v567, 4294967224
    %v629 = vlaneseq
    %v630 = vshrl.u32 %v629, 7
    %v631 = vsub.s32 %v628, %v630
    %v632 = vrot.slane %v543, %v631
    %vm633 = vcmask 654912
    %v634 = vsel %vm633, %v632, %v627
    %v635 = vadd.s32 %v567, 4294967216
    %v636 = vlaneseq
    %v637 = vshrl.u32 %v636, 7
    %v638 = vsub.s32 %v635, %v637
    %v639 = vrot.slane %v544, %v638
    %vm640 = vcmask 720512
    %v641 = vsel %vm640, %v639, %v634
    %v642 = vadd.s32 %v567, 4294967208
    %v643 = vlaneseq
    %v644 = vshrl.u32 %v643, 7
    %v645 = vsub.s32 %v642, %v644
    %v646 = vrot.slane %v545, %v645
    %vm647 = vcmask 786112
    %v648 = vsel %vm647, %v646, %v641
    %v649 = vadd.s32 %v567, 4294967200
    %v650 = vlaneseq
    %v651 = vshrl.u32 %v650, 7
    %v652 = vsub.s32 %v649, %v651
    %v653 = vrot.slane %v546, %v652
    %vm654 = vcmask 851712
    %v655 = vsel %vm654, %v653, %v648
    %v656 = vadd.s32 %v567, 4294967192
    %v657 = vlaneseq
    %v658 = vshrl.u32 %v657, 7
    %v659 = vsub.s32 %v656, %v658
    %v660 = vrot.slane %v547, %v659
    %vm661 = vcmask 917312
    %v662 = vsel %vm661, %v660, %v655
    %v663 = vadd.s32 %v567, 4294967184
    %v664 = vlaneseq
    %v665 = vshrl.u32 %v664, 7
    %v666 = vsub.s32 %v663, %v665
    %v667 = vrot.slane %v548, %v666
    %vm668 = vcmask 982912
    %v669 = vsel %vm668, %v667, %v662
    %v670 = vadd.s32 %v567, 4294967176
    %v671 = vlaneseq
    %v672 = vshrl.u32 %v671, 7
    %v673 = vsub.s32 %v670, %v672
    %v674 = vrot.slane %v549, %v673
    %vm675 = vcmask 1048512
    %v676 = vsel %vm675, %v674, %v669
    %678 = vst [vmem:[#allocation3] sm:$0x1] %v676
    // Predicated region
    $region18: #{tpu_custom_call.1} parent=1 // pred_check
      _
    $region19: #{tpu_custom_call.1} parent=1 // pred_check_branch
      %680 = sbr.rel (0) target = $region21
    $region20: #{tpu_custom_call.1} parent=1 // pred_region
      %s682 = ssub.s32 16, 16
      %683 = vsyncadd [#allocation4], %s682
      %s685 = sshll.u32 [#allocation3], 4
      %s686 = int_to_ptr.vmem [resolvable:$true] %s685
      %688 = dma.vmem_to_hbm [thread:$0]  %s686, 16, %s4, [#allocation4]
    $region21: #{tpu_custom_call.1} parent=1 // pred_fallthru
      _
    // Predicated region
    $region22: #{tpu_custom_call.1} parent=1 // pred_check
      _
    $region23: #{tpu_custom_call.1} parent=1 // pred_check_branch
      %690 = sbr.rel (0) target = $region25
    $region24: #{tpu_custom_call.1} parent=1 // pred_region
      %691 = dma.done [#allocation4], 16
    $region25: #{tpu_custom_call.1} parent=1 // pred_fallthru
      _
    %692 = vsyncpa [#allocation4], 1

</llo_original>
